<compile_context>
chip_gen: v7x
topology: tpu7x:2x2x1
jax: 0.10.0
libtpu: 0.0.40
codegen_flags: <defaults>
</compile_context>

<pallas_src>
import functools

import jax
import jax.numpy as jnp
from jax.experimental import pallas as pl
from jax.experimental.pallas import tpu as pltpu


MIN_STD = 0.1
MAX_STD = 1.0


def _round_up(x, m):
    return ((x + m - 1) // m) * m


def _repr_model_kernel(x_ref, w1_ref, b1_ref, w2_ref, b2_ref, noise_ref,
                       out_ref, *, min_std, max_std, head_width):
    """One batch tile. out_ref is a fused [TB, 3L] slab: [sample | mu | sigma]."""
    L = head_width

    # Hidden layer: x @ W1 + b1 (MXU, bf16 operands, f32 accumulate).
    h = jnp.dot(x_ref[...], w1_ref[...],
                preferred_element_type=jnp.float32) + b1_ref[...]
    # nn.LeakyReLU(True) => negative_slope == 1.0 => identity: no activation op.

    hc = h.astype(w2_ref.dtype)

    # Single fused head matmul [K, 2L]; heads recovered by static,
    # 128-lane-aligned slices (no cross-lane shuffles).
    y = jnp.dot(hc, w2_ref[...],
                preferred_element_type=jnp.float32) + b2_ref[...]
    mu = y[:, :L]
    log_sigma = y[:, L:]

    scale = max_std - min_std
    sigma = scale * jax.nn.sigmoid(log_sigma * (1.0 / scale)) + min_std
    sample = mu + noise_ref[...] * sigma

    # One wide, lane-dense (multiple-of-128) unmasked store -> one output DMA.
    out_ref[...] = jnp.concatenate([sample, mu, sigma],
                                   axis=-1).astype(out_ref.dtype)


def representation_model_forward(x, w1, b1, w2, b2, noise,
                                 min_std=MIN_STD, max_std=MAX_STD,
                                 use_bf16=True, batch_tile=256):
    """Pallas implementation of RepresentationModel.forward.

    Args:
      x:     [..., in_dim]      input features (leading dims flattened to batch)
      w1:    [in_dim, in_dim]   first Linear weight, pre-transposed (x @ w1)
      b1:    [in_dim] or [1, in_dim]
      w2:    [in_dim, 2*latent] second Linear weight, pre-transposed
      b2:    [2*latent] or [1, 2*latent]
      noise: [..., latent]      standard-normal noise (torch.randn_like(mu))

    Returns: (sample, mu, sigma), each [..., latent].
    """
    orig_dtype = x.dtype
    in_dim = x.shape[-1]
    latent_dim = noise.shape[-1]
    lead = x.shape[:-1]
    assert noise.shape[:-1] == lead

    B = 1
    for d in lead:
        B *= d
    x2 = x.reshape(B, in_dim)
    noise2 = noise.reshape(B, latent_dim)

    b1 = b1.reshape(1, -1)
    b2 = b2.reshape(1, -1)
    assert w1.shape == (in_dim, in_dim)
    assert w2.shape == (in_dim, 2 * latent_dim)

    compute_dtype = jnp.bfloat16 if use_bf16 else orig_dtype

    # Lane-dense padding to multiples of 128 (zero padding is exact for matmul).
    K = _round_up(in_dim, 128)          # contraction / hidden width
    L = _round_up(latent_dim, 128)      # per-head output width

    # Batch tile: >= packed-sublane tile of the compute dtype, and split into
    # >=2 grid steps when the batch allows it (v7x has 2 TensorCores).
    min_tb = 16 if jnp.dtype(compute_dtype) == jnp.dtype(jnp.bfloat16) else 8
    half = _round_up(max(1, (B + 1) // 2), min_tb)
    TB = max(min_tb, min(batch_tile, half))
    Bp = _round_up(B, TB)
    grid = (Bp // TB,)

    def pad2(a, r, c, dtype):
        return jnp.pad(a, ((0, r - a.shape[0]),
                           (0, c - a.shape[1]))).astype(dtype)

    x_p = pad2(x2, Bp, K, compute_dtype)
    # TODO(synk): generate noise in-kernel (pltpu.prng_seed + prng_random_bits,
    # Box-Muller) to drop this streamed input; kept as an explicit input so the
    # kernel stays bit-reproducible against the reference.
    noise_p = pad2(noise2, Bp, L, jnp.float32)

    w1_p = pad2(w1, K, K, compute_dtype)
    b1_p = pad2(b1, 1, K, jnp.float32)

    # Fused second Linear: [mu-head | sigma-head], each head padded to L lanes.
    w2_cat = jnp.concatenate(
        [pad2(w2[:, :latent_dim], K, L, compute_dtype),
         pad2(w2[:, latent_dim:], K, L, compute_dtype)], axis=1)
    b2_cat = jnp.concatenate(
        [pad2(b2[:, :latent_dim], 1, L, jnp.float32),
         pad2(b2[:, latent_dim:], 1, L, jnp.float32)], axis=1)

    kernel = functools.partial(_repr_model_kernel, min_std=min_std,
                               max_std=max_std, head_width=L)

    batch_spec = lambda cols: pl.BlockSpec((TB, cols), lambda i: (i, 0))
    # Weights/biases: constant index_map -> DMA'd once, resident across grid.
    # TODO(synk): for large in_dim on v7x (64 MiB VMEM), single-buffer these
    # resident operands (pipeline_mode=pl.Buffered(1)) to halve their footprint.
    const_spec = lambda rows, cols: pl.BlockSpec((rows, cols), lambda i: (0, 0))

    cd_bytes = jnp.dtype(compute_dtype).itemsize
    out_bytes = jnp.dtype(orig_dtype).itemsize
    flops = 2 * Bp * K * K + 2 * Bp * K * (2 * L)
    bytes_accessed = (Bp * K * cd_bytes + Bp * L * 4
                      + (K * K + K * 2 * L) * cd_bytes + (K + 2 * L) * 4
                      + Bp * 3 * L * out_bytes)
    cost = pl.CostEstimate(flops=int(flops),
                           transcendentals=int(Bp * 2 * L),
                           bytes_accessed=int(bytes_accessed))

    # Scoped-VMEM budget: streamed tiles double-buffered, resident weights
    # double-buffered by default; add slack, clamp to v7x physical (64 MiB).
    vmem_needed = (2 * (TB * K * cd_bytes + TB * L * 4 + TB * 3 * L * out_bytes)
                   + 2 * ((K * K + K * 2 * L) * cd_bytes + (K + 2 * L) * 4))
    vmem_limit = int(min(64 << 20, max(32 << 20, 2 * vmem_needed + (4 << 20))))

    out_p = pl.pallas_call(
        kernel,
        out_shape=jax.ShapeDtypeStruct((Bp, 3 * L), orig_dtype),
        grid=grid,
        in_specs=[
            batch_spec(K),            # x
            const_spec(K, K),         # w1       (resident)
            const_spec(1, K),         # b1       (resident)
            const_spec(K, 2 * L),     # w2 = [mu | sigma] heads (resident)
            const_spec(1, 2 * L),     # b2       (resident)
            batch_spec(L),            # noise
        ],
        out_specs=batch_spec(3 * L),  # fused [sample | mu | sigma] slab
        compiler_params=pltpu.CompilerParams(
            dimension_semantics=("parallel",),
            vmem_limit_bytes=vmem_limit),
        cost_estimate=cost,
    )(x_p, w1_p, b1_p, w2_cat, b2_cat, noise_p)

    rows = slice(0, B)
    sample = out_p[rows, 0 * L:0 * L + latent_dim]
    mu = out_p[rows, 1 * L:1 * L + latent_dim]
    sigma = out_p[rows, 2 * L:2 * L + latent_dim]
    out_shape = lead + (latent_dim,)
    return (sample.reshape(out_shape), mu.reshape(out_shape),
            sigma.reshape(out_shape))


def reference_forward(x, w1, b1, w2, b2, noise,
                      min_std=MIN_STD, max_std=MAX_STD, use_bf16=True):
    """Pure-JAX reference using the same bf16-operand / f32-accumulate math."""
    cdt = jnp.bfloat16 if use_bf16 else x.dtype
    b1 = b1.reshape(1, -1)
    b2 = b2.reshape(1, -1)
    h = jnp.dot(x.astype(cdt), w1.astype(cdt),
                preferred_element_type=jnp.float32) + b1
    # LeakyReLU(negative_slope=1.0) == identity
    latent_dim = noise.shape[-1]
    hc = h.astype(cdt)
    mu = jnp.dot(hc, w2[:, :latent_dim].astype(cdt),
                 preferred_element_type=jnp.float32) + b2[:, :latent_dim]
    log_sigma = jnp.dot(hc, w2[:, latent_dim:].astype(cdt),
                        preferred_element_type=jnp.float32) + b2[:, latent_dim:]
    scale = max_std - min_std
    sigma = scale * jax.nn.sigmoid(log_sigma * (1.0 / scale)) + min_std
    sample = mu + noise * sigma
    return sample, mu, sigma


def reference_forward_f32(x, w1, b1, w2, b2, noise,
                          min_std=MIN_STD, max_std=MAX_STD):
    """Full-f32 reference matching the PyTorch module exactly."""
    b1 = b1.reshape(1, -1)
    b2 = b2.reshape(1, -1)
    h = x @ w1 + b1                      # LeakyReLU(slope=1.0) == identity
    y = h @ w2 + b2
    latent_dim = noise.shape[-1]
    mu, log_sigma = y[:, :latent_dim], y[:, latent_dim:]
    scale = max_std - min_std
    sigma = scale * jax.nn.sigmoid(log_sigma / scale) + min_std
    sample = mu + noise * sigma
    return sample, mu, sigma


if __name__ == "__main__":
    # Small shapes consistent with the module: x is [batch, in_dim].
    B, in_dim, latent_dim = 8, 32, 16

    key = jax.random.PRNGKey(0)
    kx, kw1, kb1, kw2, kb2, kn, kxs, kns = jax.random.split(key, 8)

    # Deterministic parameter init (PyTorch-Linear-style uniform bounds).
    bound1 = 1.0 / jnp.sqrt(in_dim)
    w1 = jax.random.uniform(kw1, (in_dim, in_dim), jnp.float32, -bound1, bound1)
    b1 = jax.random.uniform(kb1, (1, in_dim), jnp.float32, -bound1, bound1)
    w2 = jax.random.uniform(kw2, (in_dim, 2 * latent_dim), jnp.float32,
                            -bound1, bound1)
    b2 = jax.random.uniform(kb2, (1, 2 * latent_dim), jnp.float32,
                            -bound1, bound1)

    x = jax.random.normal(kx, (B, in_dim), jnp.float32)
    # torch.randn_like(mu) -> sampled host-side and passed in (same
    # distribution / reparameterization semantics as the PyTorch module).
    noise = jax.random.normal(kn, (B, latent_dim), jnp.float32)

    sample, mu, sigma = representation_model_forward(x, w1, b1, w2, b2, noise)
    jax.block_until_ready((sample, mu, sigma))

    # Tight check vs a reference using the same bf16-operand matmuls.
    s_ref, mu_ref, sg_ref = reference_forward(x, w1, b1, w2, b2, noise)
    assert jnp.allclose(sample, s_ref, atol=2e-4, rtol=2e-4)
    assert jnp.allclose(mu, mu_ref, atol=2e-4, rtol=2e-4)
    assert jnp.allclose(sigma, sg_ref, atol=2e-4, rtol=2e-4)

    # Loose check vs the exact-f32 PyTorch-equivalent math (bf16 operand error).
    s_f32, mu_f32, sg_f32 = reference_forward_f32(x, w1, b1, w2, b2, noise)
    assert jnp.allclose(sample, s_f32, atol=3e-2, rtol=3e-2)
    assert jnp.allclose(mu, mu_f32, atol=3e-2, rtol=3e-2)
    assert jnp.allclose(sigma, sg_f32, atol=3e-2, rtol=3e-2)

    # Sequence-mode call: whole [T, B] slab runs as ONE pallas_call (weights
    # DMA'd once), grid has >1 batch tile.
    T = 4
    x_seq = jax.random.normal(kxs, (T, B, in_dim), jnp.float32)
    n_seq = jax.random.normal(kns, (T, B, latent_dim), jnp.float32)
    s_t, mu_t, sg_t = representation_model_forward(x_seq, w1, b1, w2, b2, n_seq)
    jax.block_until_ready((s_t, mu_t, sg_t))
    assert s_t.shape == (T, B, latent_dim)
    s_tr, mu_tr, sg_tr = reference_forward(
        x_seq.reshape(T * B, in_dim), w1, b1, w2, b2,
        n_seq.reshape(T * B, latent_dim))
    assert jnp.allclose(s_t.reshape(T * B, latent_dim), s_tr, atol=2e-4, rtol=2e-4)
    assert jnp.allclose(mu_t.reshape(T * B, latent_dim), mu_tr, atol=2e-4, rtol=2e-4)
    assert jnp.allclose(sg_t.reshape(T * B, latent_dim), sg_tr, atol=2e-4, rtol=2e-4)

    print("KERNEL_OK")
</pallas_src>

<mosaic_0001>
module attributes {stable_mosaic.version = 11 : i64} {
  func.func @_repr_model_kernel(%arg0: i32, %arg1: memref<16x128xbf16, #tpu.memory_space<vmem>>, %arg2: memref<128x128xbf16, #tpu.memory_space<vmem>>, %arg3: memref<1x128xf32, #tpu.memory_space<vmem>>, %arg4: memref<128x256xbf16, #tpu.memory_space<vmem>>, %arg5: memref<1x256xf32, #tpu.memory_space<vmem>>, %arg6: memref<16x128xf32, #tpu.memory_space<vmem>>, %arg7: memref<16x384xf32, #tpu.memory_space<vmem>>) attributes {dimension_semantics = [#tpu.dimension_semantics<parallel>], iteration_bounds = array<i64: 1>, scalar_prefetch = 0 : i64, scratch_operands = 0 : i64, tpu.core_type = #tpu.core_type<tc>, window_params = [{transform_indices = @transform_0, window_bounds = array<i64: 16, 128>}, {pipeline_mode = #tpu.pipeline_mode<synchronous>, transform_indices = @transform_1, window_bounds = array<i64: 128, 128>}, {pipeline_mode = #tpu.pipeline_mode<synchronous>, transform_indices = @transform_2, window_bounds = array<i64: 1, 128>}, {pipeline_mode = #tpu.pipeline_mode<synchronous>, transform_indices = @transform_3, window_bounds = array<i64: 128, 256>}, {pipeline_mode = #tpu.pipeline_mode<synchronous>, transform_indices = @transform_4, window_bounds = array<i64: 1, 256>}, {transform_indices = @transform_5, window_bounds = array<i64: 16, 128>}, {transform_indices = @transform_6, window_bounds = array<i64: 16, 384>}]} {
    %c0 = arith.constant 0 : index
    %c0_0 = arith.constant 0 : index
    %0 = vector.load %arg1[%c0, %c0_0] : memref<16x128xbf16, #tpu.memory_space<vmem>>, vector<16x128xbf16>
    %c0_1 = arith.constant 0 : index
    %c0_2 = arith.constant 0 : index
    %1 = vector.load %arg2[%c0_1, %c0_2] : memref<128x128xbf16, #tpu.memory_space<vmem>>, vector<128x128xbf16>
    %cst = arith.constant dense<0.000000e+00> : vector<16x128xf32>
    %2 = tpu.matmul %0, %1, %cst {dimension_numbers = #tpu.dot_dimension_numbers<[1], [0], [0], [1], [0, 0, 1, 1], [], []>} : vector<16x128xbf16>, vector<128x128xbf16>, vector<16x128xf32> -> vector<16x128xf32>
    %c0_3 = arith.constant 0 : index
    %c0_4 = arith.constant 0 : index
    %3 = vector.load %arg3[%c0_3, %c0_4] : memref<1x128xf32, #tpu.memory_space<vmem>>, vector<1x128xf32>
    %4 = vector.broadcast %3 : vector<1x128xf32> to vector<16x128xf32>
    %5 = arith.addf %2, %4 : vector<16x128xf32>
    %6 = arith.truncf %5 : vector<16x128xf32> to vector<16x128xbf16>
    %c0_5 = arith.constant 0 : index
    %c0_6 = arith.constant 0 : index
    %7 = vector.load %arg4[%c0_5, %c0_6] : memref<128x256xbf16, #tpu.memory_space<vmem>>, vector<128x256xbf16>
    %cst_7 = arith.constant dense<0.000000e+00> : vector<16x256xf32>
    %8 = tpu.matmul %6, %7, %cst_7 {dimension_numbers = #tpu.dot_dimension_numbers<[1], [0], [0], [1], [0, 0, 1, 1], [], []>} : vector<16x128xbf16>, vector<128x256xbf16>, vector<16x256xf32> -> vector<16x256xf32>
    %c0_8 = arith.constant 0 : index
    %c0_9 = arith.constant 0 : index
    %9 = vector.load %arg5[%c0_8, %c0_9] : memref<1x256xf32, #tpu.memory_space<vmem>>, vector<1x256xf32>
    %10 = vector.broadcast %9 : vector<1x256xf32> to vector<16x256xf32>
    %11 = arith.addf %8, %10 : vector<16x256xf32>
    %12 = vector.extract_strided_slice %11 {offsets = [0, 0], sizes = [16, 128], strides = [1, 1]} : vector<16x256xf32> to vector<16x128xf32>
    %13 = vector.extract_strided_slice %11 {offsets = [0, 128], sizes = [16, 128], strides = [1, 1]} : vector<16x256xf32> to vector<16x128xf32>
    %cst_10 = arith.constant 1.11111116 : f32
    %14 = vector.broadcast %cst_10 : f32 to vector<16x128xf32>
    %15 = arith.mulf %13, %14 : vector<16x128xf32>
    %16 = arith.negf %15 : vector<16x128xf32>
    %17 = math.exp %16 : vector<16x128xf32>
    %cst_11 = arith.constant 1.000000e+00 : f32
    %18 = vector.broadcast %cst_11 : f32 to vector<16x128xf32>
    %19 = arith.addf %18, %17 : vector<16x128xf32>
    %20 = arith.divf %18, %19 : vector<16x128xf32>
    %cst_12 = arith.constant 0.899999976 : f32
    %21 = vector.broadcast %cst_12 : f32 to vector<16x128xf32>
    %22 = arith.mulf %21, %20 : vector<16x128xf32>
    %cst_13 = arith.constant 1.000000e-01 : f32
    %23 = vector.broadcast %cst_13 : f32 to vector<16x128xf32>
    %24 = arith.addf %22, %23 : vector<16x128xf32>
    %c0_14 = arith.constant 0 : index
    %c0_15 = arith.constant 0 : index
    %25 = vector.load %arg6[%c0_14, %c0_15] : memref<16x128xf32, #tpu.memory_space<vmem>>, vector<16x128xf32>
    %26 = arith.mulf %25, %24 : vector<16x128xf32>
    %27 = arith.addf %12, %26 : vector<16x128xf32>
    %28 = tpu.concatenate %27, %12, %24 in 1 : vector<16x128xf32>, vector<16x128xf32>, vector<16x128xf32> -> vector<16x384xf32>
    %c0_16 = arith.constant 0 : index
    %c0_17 = arith.constant 0 : index
    %29 = vector.load %arg7[%c0_16, %c0_17] : memref<16x384xf32, #tpu.memory_space<vmem>>, vector<16x384xf32>
    tpu.vector_store %arg7[%c0_16, %c0_17], %28 {strides = array<i32>} : memref<16x384xf32, #tpu.memory_space<vmem>>, vector<16x384xf32>,
    return
  }
  func.func @transform_0(%arg0: i32) -> (i32, i32) {
    %c0_i32 = arith.constant 0 : i32
    %c0_i32_0 = arith.constant 0 : i32
    return %arg0, %c0_i32 : i32, i32
  }
  func.func @transform_1(%arg0: i32) -> (i32, i32) {
    %c0_i32 = arith.constant 0 : i32
    %c0_i32_0 = arith.constant 0 : i32
    %c0_i32_1 = arith.constant 0 : i32
    return %c0_i32, %c0_i32_0 : i32, i32
  }
  func.func @transform_2(%arg0: i32) -> (i32, i32) {
    %c0_i32 = arith.constant 0 : i32
    %c0_i32_0 = arith.constant 0 : i32
    %c0_i32_1 = arith.constant 0 : i32
    return %c0_i32, %c0_i32_0 : i32, i32
  }
  func.func @transform_3(%arg0: i32) -> (i32, i32) {
    %c0_i32 = arith.constant 0 : i32
    %c0_i32_0 = arith.constant 0 : i32
    %c0_i32_1 = arith.constant 0 : i32
    return %c0_i32, %c0_i32_0 : i32, i32
  }
  func.func @transform_4(%arg0: i32) -> (i32, i32) {
    %c0_i32 = arith.constant 0 : i32
    %c0_i32_0 = arith.constant 0 : i32
    %c0_i32_1 = arith.constant 0 : i32
    return %c0_i32, %c0_i32_0 : i32, i32
  }
  func.func @transform_5(%arg0: i32) -> (i32, i32) {
    %c0_i32 = arith.constant 0 : i32
    %c0_i32_0 = arith.constant 0 : i32
    return %arg0, %c0_i32 : i32, i32
  }
  func.func @transform_6(%arg0: i32) -> (i32, i32) {
    %c0_i32 = arith.constant 0 : i32
    %c0_i32_0 = arith.constant 0 : i32
    return %arg0, %c0_i32 : i32, i32
  }
}

</mosaic_0001>

<llo_original>
// kernel: tpu_custom_call.1
$region0: #{tpu_custom_call.1}
  #allocation0 [shape = 'u32[]', space=smem, size = 0x4, offset = 0x4, fixed_abs, tag = 'smem constant byte address 0x4 - core index']
  #allocation1 [shape = 'u32[144,128]{1,0:T(1,128)}', space=vmem, size = 0x12000, scoped, tag = 'internal scratch']
  %s0 = inlined_call_operand.hbm [shape: bf16[16,128], index: 0, kind: input, shape index: {}]
  %s1 = inlined_call_operand.hbm [shape: bf16[128,128], index: 1, kind: input, shape index: {}]
  %s2 = inlined_call_operand.hbm [shape: f32[1,128], index: 2, kind: input, shape index: {}]
  %s3 = inlined_call_operand.hbm [shape: bf16[128,256], index: 3, kind: input, shape index: {}]
  %s4 = inlined_call_operand.vmem [shape: f32[1,256], index: 4, kind: input, shape index: {}]
  %s5 = inlined_call_operand.vmem [shape: f32[16,128], index: 5, kind: input, shape index: {}]
  %s6 = inlined_call_operand.hbm [shape: f32[16,384], index: 6, kind: output, shape index: {}]
  %s7 = sld [smem:[#allocation0]]
  $region50: #{tpu_custom_call.1} parent=0
    _
  %s9 = ssub.s32 1, %s7
  %s10 = scalar_select 0, %s9, %s7
  $region1: #{tpu_custom_call.1} parent=0
    #allocation2 [shape = 'u8[4096]{0}', space=vmem, size = 0x1000, scoped, tag = 'input window, operand 0, single buffered']
    #allocation3 [shape = 's32[1]{0}', space=sflag, size = 0x4, scoped, tag = 'scoped memory for tpu_custom_call.1']
    #allocation4 [shape = 's32[1]{0}', space=sflag, size = 0x4, scoped, tag = 'scoped memory for tpu_custom_call.1']
    #allocation5 [shape = 'u8[32768]{0}', space=vmem, size = 0x8000, scoped, tag = 'input window, operand 1, single buffered']
    #allocation6 [shape = 's32[1]{0}', space=sflag, size = 0x4, scoped, tag = 'scoped memory for tpu_custom_call.1']
    #allocation7 [shape = 'u8[512]{0}', space=vmem, size = 0x400, scoped, tag = 'input window, operand 2, single buffered']
    #allocation8 [shape = 'u8[65536]{0}', space=vmem, size = 0x10000, scoped, tag = 'input window, operand 3, single buffered']
    #allocation9 [shape = 's32[1]{0}', space=sflag, size = 0x4, scoped, tag = 'scoped memory for tpu_custom_call.1']
    #allocation10 [shape = 'u8[24576]{0}', space=vmem, size = 0x6000, scoped, tag = 'output window, operand 0, single buffered']
    %11 = vsyncpa [#allocation3], 0
    %12 = vsyncpa [#allocation6], 0
    %13 = vsyncpa [#allocation9], 0
    %14 = vsyncpa [#allocation4], 0
    // Predicated region
    $region2: #{tpu_custom_call.1} parent=1 // pred_check
      _
    $region3: #{tpu_custom_call.1} parent=1 // pred_check_branch
      %16 = sbr.rel (0) target = $region5
    $region4: #{tpu_custom_call.1} parent=1 // pred_region
      %s18 = ssub.s32 128, 128
      %19 = vsyncadd [#allocation3], %s18
      %s20 = sshll.u32 [#allocation2], 4
      %s21 = int_to_ptr.vmem [resolvable:$true] %s20
      %26 = dma.hbm_to_vmem [thread:$0]  %s0, 128, %s21, [#allocation3], 64, 64, 4
    $region5: #{tpu_custom_call.1} parent=1 // pred_fallthru
      _
    // Predicated region
    $region6: #{tpu_custom_call.1} parent=1 // pred_check
      _
    $region7: #{tpu_custom_call.1} parent=1 // pred_check_branch
      %28 = sbr.rel (0) target = $region9
    $region8: #{tpu_custom_call.1} parent=1 // pred_region
      %s30 = ssub.s32 1024, 1024
      %31 = vsyncadd [#allocation6], %s30
      %s32 = sshll.u32 [#allocation5], 4
      %s33 = int_to_ptr.vmem [resolvable:$true] %s32
      %38 = dma.hbm_to_vmem [thread:$0]  %s1, 1024, %s33, [#allocation6], 64, 64, 4
    $region9: #{tpu_custom_call.1} parent=1 // pred_fallthru
      _
    // Predicated region
    $region10: #{tpu_custom_call.1} parent=1 // pred_check
      _
    $region11: #{tpu_custom_call.1} parent=1 // pred_check_branch
      %40 = sbr.rel (0) target = $region13
    $region12: #{tpu_custom_call.1} parent=1 // pred_region
      %s42 = ssub.s32 16, 16
      %43 = vsyncadd [#allocation6], %s42
      %s45 = sshll.u32 [#allocation7], 4
      %s46 = int_to_ptr.vmem [resolvable:$true] %s45
      %48 = dma.hbm_to_vmem [thread:$0]  %s2, 16, %s46, [#allocation6]
    $region13: #{tpu_custom_call.1} parent=1 // pred_fallthru
      _
    // Predicated region
    $region14: #{tpu_custom_call.1} parent=1 // pred_check
      _
    $region15: #{tpu_custom_call.1} parent=1 // pred_check_branch
      %50 = sbr.rel (0) target = $region17
    $region16: #{tpu_custom_call.1} parent=1 // pred_region
      %s52 = ssub.s32 2048, 2048
      %53 = vsyncadd [#allocation9], %s52
      %s54 = sshll.u32 [#allocation8], 4
      %s55 = int_to_ptr.vmem [resolvable:$true] %s54
      %60 = dma.hbm_to_vmem [thread:$0]  %s3, 2048, %s55, [#allocation9], 128, 128, 8
    $region17: #{tpu_custom_call.1} parent=1 // pred_fallthru
      _
    // Predicated region
    $region18: #{tpu_custom_call.1} parent=1 // pred_check
      _
    $region19: #{tpu_custom_call.1} parent=1 // pred_check_branch
      %62 = sbr.rel (0) target = $region21
    $region20: #{tpu_custom_call.1} parent=1 // pred_region
      _
    $region21: #{tpu_custom_call.1} parent=1 // pred_fallthru
      _
    // Predicated region
    $region22: #{tpu_custom_call.1} parent=1 // pred_check
      _
    $region23: #{tpu_custom_call.1} parent=1 // pred_check_branch
      %64 = sbr.rel (0) target = $region25
    $region24: #{tpu_custom_call.1} parent=1 // pred_region
      _
    $region25: #{tpu_custom_call.1} parent=1 // pred_fallthru
      _
    // Predicated region
    $region26: #{tpu_custom_call.1} parent=1 // pred_check
      _
    $region27: #{tpu_custom_call.1} parent=1 // pred_check_branch
      %66 = sbr.rel (0) target = $region29
    $region28: #{tpu_custom_call.1} parent=1 // pred_region
      %67 = dma.done [#allocation3], 128
    $region29: #{tpu_custom_call.1} parent=1 // pred_fallthru
      _
    // Predicated region
    $region30: #{tpu_custom_call.1} parent=1 // pred_check
      _
    $region31: #{tpu_custom_call.1} parent=1 // pred_check_branch
      %69 = sbr.rel (0) target = $region33
    $region32: #{tpu_custom_call.1} parent=1 // pred_region
      %70 = dma.done [#allocation6], 1024
    $region33: #{tpu_custom_call.1} parent=1 // pred_fallthru
      _
    // Predicated region
    $region34: #{tpu_custom_call.1} parent=1 // pred_check
      _
    $region35: #{tpu_custom_call.1} parent=1 // pred_check_branch
      %72 = sbr.rel (0) target = $region37
    $region36: #{tpu_custom_call.1} parent=1 // pred_region
      %73 = dma.done [#allocation6], 16
    $region37: #{tpu_custom_call.1} parent=1 // pred_fallthru
      _
    // Predicated region
    $region38: #{tpu_custom_call.1} parent=1 // pred_check
      _
    $region39: #{tpu_custom_call.1} parent=1 // pred_check_branch
      %75 = sbr.rel (0) target = $region41
    $region40: #{tpu_custom_call.1} parent=1 // pred_region
      %76 = dma.done [#allocation9], 2048
    $region41: #{tpu_custom_call.1} parent=1 // pred_fallthru
      _
    %v78 = vld [vmem:[#allocation2] sm:$0xf]
    %v79 = vld [vmem:[#allocation2 + $0x4] sm:$0xf]
    %v80 = vld [vmem:[#allocation5] sm:$0xf]
    %v81 = vld [vmem:[#allocation5 + $0x4] sm:$0xf]
    %v82 = vld [vmem:[#allocation5 + $0x8] sm:$0xf]
    %v83 = vld [vmem:[#allocation5 + $0xc] sm:$0xf]
    %v84 = vld [vmem:[#allocation5 + $0x10] sm:$0xf]
    %v85 = vld [vmem:[#allocation5 + $0x14] sm:$0xf]
    %v86 = vld [vmem:[#allocation5 + $0x18] sm:$0xf]
    %v87 = vld [vmem:[#allocation5 + $0x1c] sm:$0xf]
    %v88 = vld [vmem:[#allocation5 + $0x20] sm:$0xf]
    %v89 = vld [vmem:[#allocation5 + $0x24] sm:$0xf]
    %v90 = vld [vmem:[#allocation5 + $0x28] sm:$0xf]
    %v91 = vld [vmem:[#allocation5 + $0x2c] sm:$0xf]
    %v92 = vld [vmem:[#allocation5 + $0x30] sm:$0xf]
    %v93 = vld [vmem:[#allocation5 + $0x34] sm:$0xf]
    %v94 = vld [vmem:[#allocation5 + $0x38] sm:$0xf]
    %v95 = vld [vmem:[#allocation5 + $0x3c] sm:$0xf]
    %v96 = vld [vmem:[#allocation7] sm:$0x1]
    %v98 = vlaneseq
    %v99 = vshrl.u32 %v98, 7
    %v100 = vsub.s32 0, %v99
    %v101 = vrot.slane %v96, %v100
    %v105 = vunpack.c.l.b16 %v78
    %v106 = vunpack.c.l.b16 %v79
    %v107 = vpack.c.b16 %v106, %v105
    %v125 = vunpack.c.l.b16 %v80
    %v126 = vunpack.c.l.b16 %v81
    %v127 = vunpack.c.l.b16 %v82
    %v128 = vunpack.c.l.b16 %v83
    %v129 = vunpack.c.l.b16 %v84
    %v130 = vunpack.c.l.b16 %v85
    %v131 = vunpack.c.l.b16 %v86
    %v132 = vunpack.c.l.b16 %v87
    %v133 = vunpack.c.l.b16 %v88
    %v134 = vunpack.c.l.b16 %v89
    %v135 = vunpack.c.l.b16 %v90
    %v136 = vunpack.c.l.b16 %v91
    %v137 = vunpack.c.l.b16 %v92
    %v138 = vunpack.c.l.b16 %v93
    %v139 = vunpack.c.l.b16 %v94
    %v140 = vunpack.c.l.b16 %v95
    %v141 = vpack.c.b16 %v126, %v125
    %v142 = vpack.c.b16 %v128, %v127
    %v143 = vpack.c.b16 %v130, %v129
    %v144 = vpack.c.b16 %v132, %v131
    %v145 = vpack.c.b16 %v134, %v133
    %v146 = vpack.c.b16 %v136, %v135
    %v147 = vpack.c.b16 %v138, %v137
    %v148 = vpack.c.b16 %v140, %v139
    %157 = vmatprep.subr.bf16.mxu0 0
    %158 = vmatpush1.bf16.msra.mxu0 %v141
    %159 = vmatprep.subr.bf16.mxu0 0
    %160 = vmatpush1.bf16.msra.mxu0 %v142
    %161 = vmatprep.subr.bf16.mxu0 0
    %162 = vmatpush1.bf16.msra.mxu0 %v143
    %163 = vmatprep.subr.bf16.mxu0 0
    %164 = vmatpush1.bf16.msra.mxu0 %v144
    %165 = vmatprep.subr.bf16.mxu0 0
    %166 = vmatpush1.bf16.msra.mxu0 %v145
    %167 = vmatprep.subr.bf16.mxu0 0
    %168 = vmatpush1.bf16.msra.mxu0 %v146
    %169 = vmatprep.subr.bf16.mxu0 0
    %170 = vmatpush1.bf16.msra.mxu0 %v147
    %171 = vmatprep.subr.bf16.mxu0 0
    %172 = vmatpush1.bf16.msra.mxu0 %v148
    %173 = vmatprep.subr.bf16.mxu0 0
    %174 = vmatpush1.bf16.msra.mxu0 0
    %175 = vmatprep.subr.bf16.mxu0 0
    %176 = vmatpush1.bf16.msra.mxu0 0
    %177 = vmatprep.subr.bf16.mxu0 0
    %178 = vmatpush1.bf16.msra.mxu0 0
    %179 = vmatprep.subr.bf16.mxu0 0
    %180 = vmatpush1.bf16.msra.mxu0 0
    %181 = vmatprep.subr.bf16.mxu0 0
    %182 = vmatpush1.bf16.msra.mxu0 0
    %183 = vmatprep.subr.bf16.mxu0 0
    %184 = vmatpush1.bf16.msra.mxu0 0
    %185 = vmatprep.subr.bf16.mxu0 0
    %186 = vmatpush1.bf16.msra.mxu0 0
    %187 = vmatprep.subr.bf16.mxu0 0
    %188 = vmatpush1.bf16.msra.mxu0 0
    %189 = vmatprep.mubr.bf16.mxu0 0
    %190 = vmatmul.mubr.bf16.gmra.mrb[0].mxu0 %v107
    %v191 = vpop.f32.mrb[0].mxu0
    %v192 = vadd.f32 %v101, %v191
    %v193 = vpop.f32.mrb[0].mxu0
    %v194 = vpop.f32.mrb[0].mxu0
    %v195 = vadd.f32 %v101, %v194
    %v196 = vpop.f32.mrb[0].mxu0
    %197 = vdwg.mxu0
    %v198 = vpack.c.bf16 %v195, %v192
    %v199 = vld [vmem:[#allocation8] sm:$0xff]
    %v200 = vld [vmem:[#allocation8 + $0x8] sm:$0xff]
    %v201 = vld [vmem:[#allocation8 + $0x10] sm:$0xff]
    %v202 = vld [vmem:[#allocation8 + $0x18] sm:$0xff]
    %v203 = vld [vmem:[#allocation8 + $0x20] sm:$0xff]
    %v204 = vld [vmem:[#allocation8 + $0x28] sm:$0xff]
    %v205 = vld [vmem:[#allocation8 + $0x30] sm:$0xff]
    %v206 = vld [vmem:[#allocation8 + $0x38] sm:$0xff]
    %v207 = vld [vmem:[#allocation8 + $0x40] sm:$0xff]
    %v208 = vld [vmem:[#allocation8 + $0x48] sm:$0xff]
    %v209 = vld [vmem:[#allocation8 + $0x50] sm:$0xff]
    %v210 = vld [vmem:[#allocation8 + $0x58] sm:$0xff]
    %v211 = vld [vmem:[#allocation8 + $0x60] sm:$0xff]
    %v212 = vld [vmem:[#allocation8 + $0x68] sm:$0xff]
    %v213 = vld [vmem:[#allocation8 + $0x70] sm:$0xff]
    %v214 = vld [vmem:[#allocation8 + $0x78] sm:$0xff]
    %v215 = vld [vmem:[%s4] sm:$0x3]
    %v217 = vlaneseq
    %v218 = vshrl.u32 %v217, 7
    %v219 = vsub.s32 0, %v218
    %v220 = vrot.slane %v215, %v219
    %v221 = vlaneseq
    %v222 = vshrl.u32 %v221, 7
    %v223 = vsub.s32 1, %v222
    %v224 = vrot.slane %v215, %v223
    %v243 = vunpack.c.l.b16 %v199
    %v244 = vunpack.c.h.b16 %v199
    %v245 = vunpack.c.l.b16 %v200
    %v246 = vunpack.c.h.b16 %v200
    %v247 = vunpack.c.l.b16 %v201
    %v248 = vunpack.c.h.b16 %v201
    %v249 = vunpack.c.l.b16 %v202
    %v250 = vunpack.c.h.b16 %v202
    %v251 = vunpack.c.l.b16 %v203
    %v252 = vunpack.c.h.b16 %v203
    %v253 = vunpack.c.l.b16 %v204
    %v254 = vunpack.c.h.b16 %v204
    %v255 = vunpack.c.l.b16 %v205
    %v256 = vunpack.c.h.b16 %v205
    %v257 = vunpack.c.l.b16 %v206
    %v258 = vunpack.c.h.b16 %v206
    %v259 = vunpack.c.l.b16 %v207
    %v260 = vunpack.c.h.b16 %v207
    %v261 = vunpack.c.l.b16 %v208
    %v262 = vunpack.c.h.b16 %v208
    %v263 = vunpack.c.l.b16 %v209
    %v264 = vunpack.c.h.b16 %v209
    %v265 = vunpack.c.l.b16 %v210
    %v266 = vunpack.c.h.b16 %v210
    %v267 = vunpack.c.l.b16 %v211
    %v268 = vunpack.c.h.b16 %v211
    %v269 = vunpack.c.l.b16 %v212
    %v270 = vunpack.c.h.b16 %v212
    %v271 = vunpack.c.l.b16 %v213
    %v272 = vunpack.c.h.b16 %v213
    %v273 = vunpack.c.l.b16 %v214
    %v274 = vunpack.c.h.b16 %v214
    %v275 = vpack.c.b16 %v245, %v243
    %v276 = vpack.c.b16 %v246, %v244
    %v277 = vpack.c.b16 %v249, %v247
    %v278 = vpack.c.b16 %v250, %v248
    %v279 = vpack.c.b16 %v253, %v251
    %v280 = vpack.c.b16 %v254, %v252
    %v281 = vpack.c.b16 %v257, %v255
    %v282 = vpack.c.b16 %v258, %v256
    %v283 = vpack.c.b16 %v261, %v259
    %v284 = vpack.c.b16 %v262, %v260
    %v285 = vpack.c.b16 %v265, %v263
    %v286 = vpack.c.b16 %v266, %v264
    %v287 = vpack.c.b16 %v269, %v267
    %v288 = vpack.c.b16 %v270, %v268
    %v289 = vpack.c.b16 %v273, %v271
    %v290 = vpack.c.b16 %v274, %v272
    %307 = vmatprep.subr.bf16.mxu0 %v276
    %308 = vmatpush1.bf16.msra.mxu0 %v275
    %309 = vmatprep.subr.bf16.mxu0 %v278
    %310 = vmatpush1.bf16.msra.mxu0 %v277
    %311 = vmatprep.subr.bf16.mxu0 %v280
    %312 = vmatpush1.bf16.msra.mxu0 %v279
    %313 = vmatprep.subr.bf16.mxu0 %v282
    %314 = vmatpush1.bf16.msra.mxu0 %v281
    %315 = vmatprep.subr.bf16.mxu0 %v284
    %316 = vmatpush1.bf16.msra.mxu0 %v283
    %317 = vmatprep.subr.bf16.mxu0 %v286
    %318 = vmatpush1.bf16.msra.mxu0 %v285
    %319 = vmatprep.subr.bf16.mxu0 %v288
    %320 = vmatpush1.bf16.msra.mxu0 %v287
    %321 = vmatprep.subr.bf16.mxu0 %v290
    %322 = vmatpush1.bf16.msra.mxu0 %v289
    %323 = vmatprep.subr.bf16.mxu0 0
    %324 = vmatpush1.bf16.msra.mxu0 0
    %325 = vmatprep.subr.bf16.mxu0 0
    %326 = vmatpush1.bf16.msra.mxu0 0
    %327 = vmatprep.subr.bf16.mxu0 0
    %328 = vmatpush1.bf16.msra.mxu0 0
    %329 = vmatprep.subr.bf16.mxu0 0
    %330 = vmatpush1.bf16.msra.mxu0 0
    %331 = vmatprep.subr.bf16.mxu0 0
    %332 = vmatpush1.bf16.msra.mxu0 0
    %333 = vmatprep.subr.bf16.mxu0 0
    %334 = vmatpush1.bf16.msra.mxu0 0
    %335 = vmatprep.subr.bf16.mxu0 0
    %336 = vmatpush1.bf16.msra.mxu0 0
    %337 = vmatprep.subr.bf16.mxu0 0
    %338 = vmatpush1.bf16.msra.mxu0 0
    %339 = vmatprep.mubr.bf16.mxu0 0
    %340 = vmatmul.mubr.bf16.gmra.mrb[0].mxu0 %v198
    %v341 = vpop.f32.mrb[0].mxu0
    %v342 = vadd.f32 %v220, %v341
    %v343 = vpop.f32.mrb[0].mxu0
    %v344 = vadd.f32 %v224, %v343
    %v345 = vpop.f32.mrb[0].mxu0
    %v346 = vadd.f32 %v220, %v345
    %v347 = vpop.f32.mrb[0].mxu0
    %v348 = vadd.f32 %v224, %v347
    %349 = vdwg.mxu0
    %v350 = vmul.f32 %v344, 1.1111112
    %v351 = vmul.f32 %v348, 1.1111112
    %v352 = vxor.u32 %v350, 2147483648
    %v353 = vxor.u32 %v351, 2147483648
    %v354 = vmul.f32 %v352, 1.442695
    %v355 = vpow.pop %v354
    %v356 = vmul.f32 %v353, 1.442695
    %v357 = vpow.pop %v356
    %v358 = vadd.f32 %v355, 1.0
    %v359 = vadd.f32 %v357, 1.0
    %v360 = vrcp.pop %v358
    %v361 = vmul.f32 1.0, %v360
    %v362 = vrcp.pop %v359
    %v363 = vmul.f32 1.0, %v362
    %v364 = vmul.f32 %v361, 0.9
    %v365 = vmul.f32 %v363, 0.9
    %v366 = vadd.f32 %v364, 0.1
    %v367 = vadd.f32 %v365, 0.1
    %v368 = vld [vmem:[%s5] sm:$0xff]
    %v369 = vld [vmem:[%s5 + $0x8] sm:$0xff]
    %v370 = vmul.f32 %v368, %v366
    %v371 = vmul.f32 %v369, %v367
    %v372 = vadd.f32 %v342, %v370
    %v373 = vadd.f32 %v346, %v371
    %374 = vst [vmem:[#allocation10] sm:$0xff] %v372
    %375 = vst [vmem:[#allocation10 + $0x8] sm:$0xff] %v342
    %376 = vst [vmem:[#allocation10 + $0x10] sm:$0xff] %v366
    %377 = vst [vmem:[#allocation10 + $0x18] sm:$0xff] %v373
    %378 = vst [vmem:[#allocation10 + $0x20] sm:$0xff] %v346
    %379 = vst [vmem:[#allocation10 + $0x28] sm:$0xff] %v367
    // Predicated region
    $region42: #{tpu_custom_call.1} parent=1 // pred_check
      _
    $region43: #{tpu_custom_call.1} parent=1 // pred_check_branch
      %381 = sbr.rel (0) target = $region45
    $region44: #{tpu_custom_call.1} parent=1 // pred_region
      %s383 = ssub.s32 768, 768
      %384 = vsyncadd [#allocation4], %s383
      %s385 = sshll.u32 [#allocation10], 4
      %s386 = int_to_ptr.vmem [resolvable:$true] %s385
      %391 = dma.vmem_to_hbm [thread:$0]  %s386, 768, %s6, [#allocation4], 384, 384, 24
    $region45: #{tpu_custom_call.1} parent=1 // pred_fallthru
      _
    // Predicated region
    $region46: #{tpu_custom_call.1} parent=1 // pred_check
      _
    $region47: #{tpu_custom_call.1} parent=1 // pred_check_branch
      %393 = sbr.rel (0) target = $region49
    $region48: #{tpu_custom_call.1} parent=1 // pred_region
      %394 = dma.done [#allocation4], 768
    $region49: #{tpu_custom_call.1} parent=1 // pred_fallthru
      _
    %395 = vsyncpa [#allocation3], 1
    %396 = vsyncpa [#allocation6], 1
    %397 = vsyncpa [#allocation9], 1
    %398 = vsyncpa [#allocation4], 1

</llo_original>
